<compile_context>
chip_gen: v7x
topology: tpu7x:2x2x1
jax: 0.10.0
libtpu: 0.0.40
codegen_flags: <defaults>
</compile_context>

<pallas_src>
import functools
import math
from typing import Optional

import jax
import jax.numpy as jnp
import numpy as np
from jax.experimental import pallas as pl
from jax.experimental.pallas import tpu as pltpu


# --------------------------------------------------------------------------- #
# Kernel                                                                      #
# --------------------------------------------------------------------------- #
def _scale_kernel(x_ref, w_ref, o_ref):
    # Pure VPU elementwise scale; w_ref broadcasts along the dims where its
    # block size is 1 (rows and/or lanes).
    o_ref[...] = x_ref[...].astype(o_ref.dtype) * w_ref[...].astype(o_ref.dtype)


# --------------------------------------------------------------------------- #
# Hardware / tiling helpers                                                   #
# --------------------------------------------------------------------------- #
def _round_up(x: int, m: int) -> int:
    return ((x + m - 1) // m) * m


def _round_down(x: int, m: int) -> int:
    return (x // m) * m


def _sublane_pack(dtype) -> int:
    # Rows per packed 32-bit sublane group: 8 (f32), 16 (bf16), 32 (int8/fp8).
    return max(8, 32 // np.dtype(dtype).itemsize)


def _chip_params():
    """Returns (vmem_ceiling_bytes, per-step byte budget, multi_core)."""
    vmem = 64 << 20            # conservative default if the query is unavailable
    cores = None
    try:
        info = pltpu.get_tpu_info()
        for attr in ("vmem_capacity_bytes", "vmem_bytes", "vmem_size_bytes"):
            v = getattr(info, attr, None)
            if isinstance(v, (int, np.integer)) and int(v) > 0:
                vmem = int(v)
                break
        for attr in ("num_cores", "tensorcore_count", "num_tensorcores", "core_count"):
            v = getattr(info, attr, None)
            if isinstance(v, (int, np.integer)) and int(v) > 0:
                cores = int(v)
                break
    except Exception:
        pass
    small_vmem = vmem <= (64 << 20)            # v7x-class TensorCore
    multi_core = (cores > 1) if cores is not None else small_vmem
    # Never request all of VMEM: leave headroom for compiler-internal scratch.
    ceiling = max(vmem - max(8 << 20, vmem // 8), 16 << 20)
    # Combined (in + out) bytes per grid step per buffer.  Bigger tiles amortize
    # the ~0.35 us/step overhead; v7x must stay well inside its 64 MiB VMEM.
    budget = (12 << 20) if small_vmem else (20 << 20)
    budget = min(budget, max(1 << 20, ceiling // 4))   # safety: 2x(in+out)+w fits
    return ceiling, budget, multi_core


def _pick_tiles(shape, x_dtype, o_dtype, budget, multi_core):
    d0, d1, d2 = shape
    pack = max(_sublane_pack(x_dtype), _sublane_pack(o_dtype))
    be = np.dtype(x_dtype).itemsize + np.dtype(o_dtype).itemsize   # in+out bytes/elem

    # Lanes: keep the full row if a minimum (pack-row) block fits the budget,
    # otherwise tile the last dim in multiples of 512 lanes (lane-dense stores,
    # bounded VMEM for arbitrarily wide rows on every generation).
    if d2 <= 512 or d2 * pack * be <= budget:
        t2 = d2
    else:
        t2 = max(512, _round_down(budget // (pack * be), 512))
    lanes_pad = _round_up(t2, 128)

    # Sublanes (second-to-last dim), multiples of the dtype pack or the full dim.
    max1 = max(1, budget // (lanes_pad * be))
    t1 = d1 if max1 >= d1 else min(d1, max(pack, _round_down(max1, pack)))
    rows_pad = _round_up(t1, pack)

    # Leading dim.
    t0 = max(1, min(d0, budget // max(1, rows_pad * lanes_pad * be)))

    # v7x: a grid of 1 idles one of the two TensorCores; force >= 2 steps when
    # the tensor allows it.  Single-core chips keep the biggest tiles instead.
    if multi_core and pl.cdiv(d0, t0) * pl.cdiv(d1, t1) * pl.cdiv(d2, t2) == 1:
        if d0 >= 2:
            t0 = pl.cdiv(d0, 2)
        elif d1 >= 2 * pack:
            t1 = _round_up(pl.cdiv(d1, 2), pack)
        elif d2 >= 256:
            t2 = _round_up(pl.cdiv(d2, 2), 128)
        # else: too small for a useful split.
    return int(t0), int(t1), int(t2)


def _footprint(t0, t1, t2, dtype):
    # Padded VMEM footprint of one (t0, t1, t2) block of `dtype`.
    return (t0 * _round_up(t1, _sublane_pack(dtype)) * _round_up(t2, 128)
            * np.dtype(dtype).itemsize)


# --------------------------------------------------------------------------- #
# Generic broadcast-scale driver                                              #
# --------------------------------------------------------------------------- #
def _scale_bcast(x3: jax.Array, w3: jax.Array, out_dtype, *, donate: bool) -> jax.Array:
    """y = x3 * w3 with x3: (d0, d1, d2) and w3: (1, d1 or 1, d2 or 1)."""
    d0, d1, d2 = x3.shape
    _, w1, w2 = w3.shape
    ceiling, budget, multi_core = _chip_params()
    t0, t1, t2 = _pick_tiles((d0, d1, d2), x3.dtype, out_dtype, budget, multi_core)
    grid = (pl.cdiv(d0, t0), pl.cdiv(d1, t1), pl.cdiv(d2, t2))

    follow1 = w1 != 1        # weight varies along the sublane (row) dim
    follow2 = w2 != 1        # weight varies along the lane dim
    wb1 = t1 if follow1 else 1
    wb2 = t2 if follow2 else 1

    def x_index(b, r, l):
        return (b, r, l)

    def w_index(b, r, l):
        return (0, r if follow1 else 0, l if follow2 else 0)

    x_item = np.dtype(x3.dtype).itemsize
    o_item = np.dtype(out_dtype).itemsize
    w_item = np.dtype(w3.dtype).itemsize

    # Double-buffered in + out + weight blocks, padded (sublane, lane) footprints
    # of the actual input AND output dtypes.
    needed = 2 * (_footprint(t0, t1, t2, x3.dtype)
                  + _footprint(t0, t1, t2, out_dtype)
                  + _footprint(1, wb1, wb2, w3.dtype))
    vmem_limit = int(min(max(needed + (2 << 20), 16 << 20), ceiling))

    # "inplace" semantics: donate the activation buffer into the output.
    aliases = {0: 0} if (donate and np.dtype(x3.dtype) == np.dtype(out_dtype)) else {}

    return pl.pallas_call(
        _scale_kernel,
        out_shape=jax.ShapeDtypeStruct((d0, d1, d2), out_dtype),
        grid_spec=pltpu.PrefetchScalarGridSpec(
            num_scalar_prefetch=0,
            grid=grid,
            in_specs=[
                pl.BlockSpec((t0, t1, t2), x_index),
                pl.BlockSpec((1, wb1, wb2), w_index),
            ],
            out_specs=pl.BlockSpec((t0, t1, t2), x_index),
        ),
        compiler_params=pltpu.CompilerParams(
            dimension_semantics=("parallel", "parallel", "parallel"),
            vmem_limit_bytes=vmem_limit,
        ),
        cost_estimate=pl.CostEstimate(
            flops=d0 * d1 * d2,
            transcendentals=0,
            bytes_accessed=d0 * d1 * d2 * (x_item + o_item) + w3.size * w_item,
        ),
        input_output_aliases=aliases,
    )(x3, w3)


# --------------------------------------------------------------------------- #
# Public wrapper (LayerScale.forward equivalent)                              #
# --------------------------------------------------------------------------- #
def layer_scale(x: jax.Array, weight: jax.Array, data_format: str = "channels_last",
                inplace: bool = False, promote_dtype: Optional[bool] = None) -> jax.Array:
    """JAX/Pallas equivalent of LayerScale.forward.

    inplace=True donates the activation inside the pallas_call
    (input_output_aliases); for true end-to-end in-place, also donate x at the
    caller's jit boundary.  promote_dtype=None (default) keeps low-precision
    activations' dtype (weight cast down) to halve HBM writes; pass True for
    exact torch promotion (e.g. bf16 x * f32 weight -> f32 output).
    """
    assert data_format in ("channels_last", "channels_first"), (
        "'data_format' could only be channels_last or channels_first.")
    x = jnp.asarray(x)
    weight = jnp.asarray(weight).reshape(-1)

    if promote_dtype is None:
        promote = not (jnp.issubdtype(x.dtype, jnp.floating)
                       and np.dtype(x.dtype).itemsize < 4
                       and np.dtype(weight.dtype).itemsize >= 4)
    else:
        promote = bool(promote_dtype)
    out_dtype = jnp.promote_types(x.dtype, weight.dtype) if promote else x.dtype
    if not promote:
        weight = weight.astype(x.dtype)

    if data_format == "channels_first":
        assert x.ndim >= 2, "channels_first expects at least (B, C, ...)"
        b, c = x.shape[0], x.shape[1]
        assert weight.shape[0] == c, "weight must have `dim` == C"
        s = math.prod(x.shape[2:]) if x.ndim > 2 else 1
        if s % 128 == 0:
            # Lane-dense (B, C, S) view; weight stays a tiny (1, C, 1) block
            # that is re-fetched only when the C grid index changes.
            y = _scale_bcast(x.reshape(b, c, s), weight.reshape(1, c, 1),
                             out_dtype, donate=inplace)
        else:
            # Spatial size not 128-aligned: flatten each batch element so the
            # store width is C*S (lane-dense to within <128 elements) instead of
            # wasting (128 - S % 128)/128 of store bandwidth on every row.
            # Costs a one-off repeat(weight, S) expansion (~1/B of the traffic).
            # TODO(synk): cache the expanded weight per shape (pure function of
            # the parameter) or fuse this scale into the producer's epilogue.
            w_row = jnp.repeat(weight, s).reshape(1, 1, c * s)
            y = _scale_bcast(x.reshape(1, b, c * s), w_row, out_dtype,
                             donate=inplace)
        return y.reshape(x.shape)

    # channels_last: (..., C) -> (1, rows, C); fold rows into lanes if possible.
    c = x.shape[-1]
    assert weight.shape[0] == c, "weight must have `dim` == C"
    rows = math.prod(x.shape[:-1]) if x.ndim > 1 else 1
    x2 = x.reshape(rows, c)
    w_row = weight
    if c % 128 != 0 and rows > 1:
        k = 128 // math.gcd(c, 128)   # smallest fold giving a 128-multiple width
        if rows % k == 0:
            # Free contiguous reshape: lane-dense, unmasked stores (C=32 -> 128).
            x2 = x2.reshape(rows // k, k * c)
            w_row = jnp.tile(weight, k)
        # else: run unfolded.  Padding rows (jnp.pad) would cost a full extra
        # read+write of x, which is worse than the masked-store penalty here.
        # TODO(synk): split into folded-main + small-remainder calls if hot.
    y = _scale_bcast(x2[None], w_row.reshape(1, 1, -1), out_dtype, donate=inplace)
    return y.reshape(x.shape)


# --------------------------------------------------------------------------- #
# Demo / self-test                                                            #
# --------------------------------------------------------------------------- #
if __name__ == "__main__":
    key = jax.random.PRNGKey(0)
    dim = 32
    layer_scale_init_value = 1e-5
    # nn.Parameter(torch.ones(dim) * init) equivalent.
    weight = jnp.ones((dim,), dtype=jnp.float32) * layer_scale_init_value

    k1, k2, k3, k4 = jax.random.split(key, 4)

    # channels_last (B, N, C) = (2, 8, 32): folds 4 rows into lanes.
    x_cl = jax.random.normal(k1, (2, 8, dim), dtype=jnp.float32)
    ref_cl = x_cl * weight

    # channels_first, spatial % 128 == 0 -> 3-D lane-dense path.
    x_cf = jax.random.normal(k2, (2, dim, 16, 16), dtype=jnp.float32)
    ref_cf = x_cf * weight.reshape(-1, 1, 1)

    # channels_first, spatial % 128 != 0 -> flattened (1, B, C*S) path.
    x_cf2 = jax.random.normal(k3, (2, dim, 7, 7), dtype=jnp.float32)
    ref_cf2 = x_cf2 * weight.reshape(-1, 1, 1)

    # bf16 fast path: output stays bf16 (weight cast down in the wrapper).
    x_bf = jax.random.normal(k4, (2, 8, dim), dtype=jnp.bfloat16)
    ref_bf = x_bf * weight.astype(jnp.bfloat16)

    f_cl = jax.jit(functools.partial(layer_scale, data_format="channels_last"))
    f_cf = jax.jit(functools.partial(layer_scale, data_format="channels_first",
                                     inplace=True))
    f_cf2 = jax.jit(functools.partial(layer_scale, data_format="channels_first"))

    y_cl = jax.block_until_ready(f_cl(x_cl, weight))
    y_cf = jax.block_until_ready(f_cf(x_cf, weight))
    y_cf2 = jax.block_until_ready(f_cf2(x_cf2, weight))
    y_bf = jax.block_until_ready(f_cl(x_bf, weight))

    assert y_cl.shape == x_cl.shape and y_cf.shape == x_cf.shape
    assert y_cf2.shape == x_cf2.shape and y_bf.shape == x_bf.shape
    assert jnp.allclose(y_cl, ref_cl, rtol=1e-5, atol=1e-9), "channels_last mismatch"
    assert jnp.allclose(y_cf, ref_cf, rtol=1e-5, atol=1e-9), "channels_first mismatch"
    assert jnp.allclose(y_cf2, ref_cf2, rtol=1e-5, atol=1e-9), "channels_first(ragged) mismatch"
    assert y_bf.dtype == jnp.bfloat16, "bf16 fast path should keep bf16 output"
    assert jnp.allclose(y_bf.astype(jnp.float32), ref_bf.astype(jnp.float32),
                        rtol=2e-2, atol=1e-7), "bf16 fast path mismatch"

    print("KERNEL_OK")
</pallas_src>

<mosaic_0001>
module attributes {stable_mosaic.version = 11 : i64} {
  func.func @_scale_kernel(%arg0: i32, %arg1: i32, %arg2: i32, %arg3: memref<1x4x128xf32, #tpu.memory_space<vmem>>, %arg4: memref<1x1x128xf32, #tpu.memory_space<vmem>>, %arg5: memref<1x4x128xf32, #tpu.memory_space<vmem>>) attributes {dimension_semantics = [#tpu.dimension_semantics<parallel>, #tpu.dimension_semantics<parallel>, #tpu.dimension_semantics<parallel>], iteration_bounds = array<i64: 1, 1, 1>, scalar_prefetch = 0 : i64, scratch_operands = 0 : i64, tpu.core_type = #tpu.core_type<tc>, window_params = [{transform_indices = @transform_0, window_bounds = array<i64: 1, 4, 128>}, {transform_indices = @transform_1, window_bounds = array<i64: 1, 1, 128>}, {transform_indices = @transform_2, window_bounds = array<i64: 1, 4, 128>}]} {
    %c0 = arith.constant 0 : index
    %c0_0 = arith.constant 0 : index
    %c0_1 = arith.constant 0 : index
    %0 = vector.load %arg3[%c0, %c0_0, %c0_1] : memref<1x4x128xf32, #tpu.memory_space<vmem>>, vector<1x4x128xf32>
    %c0_2 = arith.constant 0 : index
    %c0_3 = arith.constant 0 : index
    %c0_4 = arith.constant 0 : index
    %1 = vector.load %arg4[%c0_2, %c0_3, %c0_4] : memref<1x1x128xf32, #tpu.memory_space<vmem>>, vector<1x1x128xf32>
    %2 = vector.broadcast %1 : vector<1x1x128xf32> to vector<1x4x128xf32>
    %3 = arith.mulf %0, %2 : vector<1x4x128xf32>
    %c0_5 = arith.constant 0 : index
    %c0_6 = arith.constant 0 : index
    %c0_7 = arith.constant 0 : index
    %4 = vector.load %arg5[%c0_5, %c0_6, %c0_7] : memref<1x4x128xf32, #tpu.memory_space<vmem>>, vector<1x4x128xf32>
    tpu.vector_store %arg5[%c0_5, %c0_6, %c0_7], %3 {strides = array<i32>} : memref<1x4x128xf32, #tpu.memory_space<vmem>>, vector<1x4x128xf32>,
    return
  }
  func.func @transform_0(%arg0: i32, %arg1: i32, %arg2: i32) -> (i32, i32, i32) {
    %c0_i32 = arith.constant 0 : i32
    return %arg0, %arg1, %arg2 : i32, i32, i32
  }
  func.func @transform_1(%arg0: i32, %arg1: i32, %arg2: i32) -> (i32, i32, i32) {
    %c0_i32 = arith.constant 0 : i32
    %c0_i32_0 = arith.constant 0 : i32
    %c0_i32_1 = arith.constant 0 : i32
    return %c0_i32, %c0_i32_0, %arg2 : i32, i32, i32
  }
  func.func @transform_2(%arg0: i32, %arg1: i32, %arg2: i32) -> (i32, i32, i32) {
    %c0_i32 = arith.constant 0 : i32
    return %arg0, %arg1, %arg2 : i32, i32, i32
  }
}

</mosaic_0001>

<llo_original>
// kernel: tile.8
$region0: #{tile.8}
  #allocation0 [shape = 's32[1]{0}', space=sflag, size = 0x4, scoped, tag = 'scoped memory for tile.8']
  %s0 = inlined_call_operand.vmem [shape: f32[32], index: 0, kind: input, shape index: {}]
  %s1 = inlined_call_operand.vmem [shape: f32[4,32], index: 1, kind: output, shape index: {}]
  // Predicated region
  $region2: #{tile.8} parent=0 // pred_check
    _
  $region3: #{tile.8} parent=0 // pred_check_branch
    %3 = sbr.rel (0) target = $region5
  $region4: #{tile.8} parent=0 // pred_region
    _
  $region5: #{tile.8} parent=0 // pred_fallthru
    _
  %v4 = vld [vmem:[%s0] ss:$0 sm:$0xff]
  %5 = vst [vmem:[%s1] sm:$0xf] %v4

// kernel: tile.9
$region0: #{tile.9}
  %s0 = inlined_call_operand.vmem [shape: f32[4,32], index: 0, kind: input, shape index: {}]
  %s1 = inlined_call_operand.vmem [shape: f32[1,1,128], index: 1, kind: output, shape index: {}]
  $region1: #{tile.9} parent=0
    #allocation0 [shape = 'u8[4096]{0}', space=vmem, size = 0x1000, scoped, tag = 'scoped mem for output reshape']
    #allocation1 [shape = 'u8[4096]{0}', space=vmem, size = 0x1000, scoped, tag = 'scoped mem for input reshape']
    %s3 = sshllo.u32 0, 4
    %v4 = vld [vmem:[%s0] sm:%s3]
    %5 = vst [vmem:[#allocation1] sm:%s3] %v4
    %v6 = vld [vmem:[#allocation1] sm:$0x1]
    %vm7 = vcmask 261120
    %8 = vst.msk [vmem:[#allocation0] sm:$0x1] %vm7, %v6
    %s9 = scalar_lea.vmem [#allocation1], 3
    %v10 = vld [vmem:[%s9] sm:$0x1]
    %11 = vrot.lane.b32.xlu0 %v10, 96
    %v12 = vpop.permute.xlu0 %11
    %vm13 = vcmask 1048320
    %14 = vst.msk [vmem:[#allocation0] sm:$0x1] %vm13, %v12
    %s15 = scalar_lea.vmem [#allocation1], 2
    %v16 = vld [vmem:[%s15] sm:$0x1]
    %17 = vrot.lane.b32.xlu0 %v16, 64
    %v18 = vpop.permute.xlu0 %17
    %vm19 = vcmask 785920
    %20 = vst.msk [vmem:[#allocation0] sm:$0x1] %vm19, %v18
    %s21 = scalar_lea.vmem [#allocation1], 1
    %v22 = vld [vmem:[%s21] sm:$0x1]
    %23 = vrot.lane.b32.xlu0 %v22, 32
    %v24 = vpop.permute.xlu0 %23
    %vm25 = vcmask 523520
    %26 = vst.msk [vmem:[#allocation0] sm:$0x1] %vm25, %v24
    %s28 = sshllo.u32 0, 1
    %v30 = vld [vmem:[#allocation0] sm:%s28]
    %s31 = sshllo.u32 0, 1
    %32 = vst [vmem:[%s1] sm:%s31] %v30

// kernel: layer_scale.1
$region0: #{layer_scale.1}
  #allocation0 [shape = 'u32[]', space=smem, size = 0x4, offset = 0x4, fixed_abs, tag = 'smem constant byte address 0x4 - core index']
  #allocation1 [shape = 'u32[144,128]{1,0:T(1,128)}', space=vmem, size = 0x12000, scoped, tag = 'internal scratch']
  %s0 = inlined_call_operand.vmem [shape: f32[1,4,128], index: 0, kind: input, shape index: {}]
  %s1 = inlined_call_operand.vmem [shape: f32[1,1,128], index: 1, kind: input, shape index: {}]
  %s2 = inlined_call_operand.vmem [shape: f32[1,4,128], index: 2, kind: output, shape index: {}]
  %s3 = sld [smem:[#allocation0]]
  $region18: #{layer_scale.1} parent=0
    _
  %s5 = ssub.s32 1, %s3
  %s6 = scalar_select 0, %s5, %s3
  // Predicated region
  $region2: #{layer_scale.1} parent=0 // pred_check
    _
  $region3: #{layer_scale.1} parent=0 // pred_check_branch
    %8 = sbr.rel (0) target = $region5
  $region4: #{layer_scale.1} parent=0 // pred_region
    _
  $region5: #{layer_scale.1} parent=0 // pred_fallthru
    _
  // Predicated region
  $region6: #{layer_scale.1} parent=0 // pred_check
    _
  $region7: #{layer_scale.1} parent=0 // pred_check_branch
    %10 = sbr.rel (0) target = $region9
  $region8: #{layer_scale.1} parent=0 // pred_region
    _
  $region9: #{layer_scale.1} parent=0 // pred_fallthru
    _
  %v11 = vld [vmem:[%s0] sm:$0xf]
  %v12 = vld [vmem:[%s1] sm:$0x1]
  %v14 = vlaneseq
  %v15 = vshrl.u32 %v14, 7
  %v16 = vsub.s32 0, %v15
  %v17 = vrot.slane %v12, %v16
  %v19 = vmul.f32 %v11, %v17
  %20 = vst [vmem:[%s2] sm:$0xf] %v19
  // Predicated region
  $region10: #{layer_scale.1} parent=0 // pred_check
    _
  $region11: #{layer_scale.1} parent=0 // pred_check_branch
    %22 = sbr.rel (0) target = $region13
  $region12: #{layer_scale.1} parent=0 // pred_region
    _
  $region13: #{layer_scale.1} parent=0 // pred_fallthru
    _
  // Predicated region
  $region14: #{layer_scale.1} parent=0 // pred_check
    _
  $region15: #{layer_scale.1} parent=0 // pred_check_branch
    %24 = sbr.rel (0) target = $region17
  $region16: #{layer_scale.1} parent=0 // pred_region
    _
  $region17: #{layer_scale.1} parent=0 // pred_fallthru
    _

</llo_original>
